<compile_context>
chip_gen: v6e
topology: v6e:2x2x1
jax: 0.10.0
libtpu: 0.0.40
codegen_flags: <defaults>
</compile_context>

<pallas_src>
import math

import jax
import jax.numpy as jnp
from jax.experimental import pallas as pl
from jax.experimental.pallas import tpu as pltpu

EPS = 1e-5
H = 128        # hidden width of layer-1 output / layer-6 input (already lane-aligned)
BATCH_Q = 16   # batch padding quantum (bf16 sublane tile = 16 rows)


def _round_up(n, m):
    return ((n + m - 1) // m) * m


def _cdiv(a, b):
    return -(-a // b)


# ---------------------------------------------------------------------------
# Pallas kernel: the whole 6-layer MLP fused, tiled over the batch only.
# ---------------------------------------------------------------------------
def _mlp_kernel(x_ref, w1_ref, wmid_ref, w6_ref, bstack_ref, b6_ref, o_ref):
    # In-kernel f32->bf16 cast: free VPU work hidden under the MXU, and the x DMA
    # stays un-padded (tb, F) instead of (tb, 128).
    x = x_ref[...].astype(jnp.bfloat16)
    # Layer 1: F -> 128   (BN folded, ReLU; Dropout identity in eval)
    h = jnp.maximum(
        jnp.dot(x, w1_ref[...], preferred_element_type=jnp.float32)
        + bstack_ref[0], 0.0)
    # Layers 2..5: 128 -> 128 (64/32 real widths, zero-padded), statically unrolled
    for li in range(4):
        h = jnp.maximum(
            jnp.dot(h.astype(jnp.bfloat16), wmid_ref[li],
                    preferred_element_type=jnp.float32)
            + bstack_ref[li + 1], 0.0)
    # Layer 6: 128 -> out_pad (no BN / ReLU)
    y = jnp.dot(h.astype(jnp.bfloat16), w6_ref[...],
                preferred_element_type=jnp.float32) + b6_ref[...]
    o_ref[...] = y.astype(o_ref.dtype)


# ---------------------------------------------------------------------------
# Wrapper
# ---------------------------------------------------------------------------
def mlp_forward(x, packed, *, tb=2048, out_dtype=jnp.bfloat16, return_padded=False):
    """x: (B, input_size) float32. packed: dict from pack_params."""
    B, F = x.shape
    assert F == packed["in_features"]
    out_pad = packed["w6"].shape[1]
    out_features = packed["out_features"]

    # --- batch tiling policy ---------------------------------------------
    # Pad B only to a small quantum, then pick the tile as a divisor-ish split of
    # the padded batch (avoids padding almost a whole extra tile for B = tb+1).
    B_pad_min = _round_up(B, BATCH_Q)
    num_steps = max(1, _cdiv(B_pad_min, tb))
    # v7x megacore: give both TensorCores work when the batch is big enough.
    if num_steps == 1 and B_pad_min >= 512:
        num_steps = 2
    tb_eff = _round_up(_cdiv(B_pad_min, num_steps), BATCH_Q)
    B_pad = tb_eff * num_steps

    # Zero-pad the batch only (padded rows produce garbage but are sliced away).
    x_p = x if B_pad == B else jnp.pad(x, ((0, B_pad - B), (0, 0)))

    out = pl.pallas_call(
        _mlp_kernel,
        out_shape=jax.ShapeDtypeStruct((B_pad, out_pad), out_dtype),
        grid_spec=pltpu.PrefetchScalarGridSpec(
            num_scalar_prefetch=0,
            grid=(num_steps,),
            in_specs=[
                pl.BlockSpec((tb_eff, F), lambda i: (i, 0)),    # x tile (un-padded F)
                pl.BlockSpec((F, H), lambda i: (0, 0)),         # w1
                pl.BlockSpec((4, H, H), lambda i: (0, 0, 0)),   # w2..w5 stacked
                pl.BlockSpec((H, out_pad), lambda i: (0, 0)),   # w6
                pl.BlockSpec((5, 1, H), lambda i: (0, 0, 0)),   # b1..b5 stacked
                pl.BlockSpec((1, out_pad), lambda i: (0, 0)),   # b6
            ],
            out_specs=pl.BlockSpec((tb_eff, out_pad), lambda i: (i, 0)),
        ),
        compiler_params=pltpu.CompilerParams(
            dimension_semantics=("parallel",)),
    )(x_p, packed["w1"], packed["wmid"], packed["w6"],
      packed["bstack"], packed["b6"])

    if return_padded:
        return out  # (B_pad, out_pad) bf16, lane-dense; caller slices/consumes
    return out[:B, :out_features]


# ---------------------------------------------------------------------------
# Parameter construction (PyTorch-shaped raw params) and packing
# ---------------------------------------------------------------------------
def make_raw_params(key, input_size, output_size):
    """Deterministic synthetic module parameters in PyTorch layout/shapes."""
    dims = [input_size, 128, 64, 32, 64, 128, output_size]
    keys = iter(jax.random.split(key, 36))
    layers = []
    for li in range(6):
        fan_in, fan_out = dims[li], dims[li + 1]
        bound = 1.0 / math.sqrt(fan_in)
        layer = dict(
            w=jax.random.uniform(next(keys), (fan_out, fan_in),
                                 minval=-bound, maxval=bound, dtype=jnp.float32),
            b=jax.random.uniform(next(keys), (fan_out,),
                                 minval=-bound, maxval=bound, dtype=jnp.float32),
        )
        if li < 5:  # BatchNorm1d follows the first five Linear layers
            layer["gamma"] = 1.0 + 0.1 * jax.random.normal(next(keys), (fan_out,), jnp.float32)
            layer["beta"] = 0.1 * jax.random.normal(next(keys), (fan_out,), jnp.float32)
            layer["rmean"] = 0.05 * jax.random.normal(next(keys), (fan_out,), jnp.float32)
            layer["rvar"] = 1.0 + 0.1 * jax.random.uniform(next(keys), (fan_out,), dtype=jnp.float32)
        layers.append(layer)
    return layers


def pack_params(raw, input_size, output_size):
    """Fold BN into Linear, zero-pad hidden/output feature dims, pack into few arrays."""
    out_pad = _round_up(output_size, H)

    ws, bs = [], []
    for layer in raw:
        w = layer["w"].T              # (in, out)
        b = layer["b"]                # (out,)
        if "gamma" in layer:          # fold eval-mode BatchNorm
            s = layer["gamma"] / jnp.sqrt(layer["rvar"] + EPS)
            t = layer["beta"] - layer["rmean"] * s
            w = w * s[None, :]
            b = b * s + t
        ws.append(w)
        bs.append(b)

    def pad2(w, rows, cols):
        return jnp.pad(w, ((0, rows - w.shape[0]), (0, cols - w.shape[1])))

    def pad1(b, cols):
        return jnp.pad(b, (0, cols - b.shape[0]))

    # w1 keeps its true row count (F) so the input x needs no feature padding.
    w1 = pad2(ws[0], ws[0].shape[0], H).astype(jnp.bfloat16)                 # (F, 128)
    wmid = jnp.stack([pad2(ws[i], H, H) for i in range(1, 5)]).astype(jnp.bfloat16)
    w6 = pad2(ws[5], H, out_pad).astype(jnp.bfloat16)
    bstack = jnp.stack([pad1(bs[i], H) for i in range(5)])[:, None, :].astype(jnp.float32)
    b6 = pad1(bs[5], out_pad)[None, :].astype(jnp.float32)

    return dict(w1=w1, wmid=wmid, w6=w6, bstack=bstack, b6=b6,
                in_features=input_size, out_features=output_size)


# ---------------------------------------------------------------------------
# References
# ---------------------------------------------------------------------------
def reference_forward_packed(x, packed, out_dtype=jnp.bfloat16):
    """Plain-JAX replica of the exact kernel computation (bf16 matmuls, folded BN)."""
    h = x.astype(jnp.bfloat16)
    h = jnp.maximum(jnp.dot(h, packed["w1"], preferred_element_type=jnp.float32)
                    + packed["bstack"][0], 0.0)
    for li in range(4):
        h = jnp.maximum(jnp.dot(h.astype(jnp.bfloat16), packed["wmid"][li],
                                preferred_element_type=jnp.float32)
                        + packed["bstack"][li + 1], 0.0)
    y = jnp.dot(h.astype(jnp.bfloat16), packed["w6"],
                preferred_element_type=jnp.float32) + packed["b6"]
    return y.astype(out_dtype)[:, :packed["out_features"]]


def reference_forward_module(x, raw):
    """Faithful f32 eval-mode module semantics (unfolded Linear + BN + ReLU)."""
    h = x
    for layer in raw:
        h = h @ layer["w"].T + layer["b"]
        if "gamma" in layer:
            h = layer["gamma"] * (h - layer["rmean"]) / jnp.sqrt(layer["rvar"] + EPS) + layer["beta"]
            h = jnp.maximum(h, 0.0)
            # Dropout: identity in eval mode
    return h


# ---------------------------------------------------------------------------
if __name__ == "__main__":
    input_size, output_size = 32, 32
    B = 8

    key = jax.random.PRNGKey(0)
    kx, kp = jax.random.split(key)
    x = jax.random.normal(kx, (B, input_size), dtype=jnp.float32)

    raw = make_raw_params(kp, input_size, output_size)
    packed = pack_params(raw, input_size, output_size)

    out = jax.block_until_ready(mlp_forward(x, packed))
    assert out.shape == (B, output_size)
    out_f32 = out.astype(jnp.float32)

    # Tight check vs a plain-JAX replica of the exact kernel math (bf16 matmuls/output).
    ref_tight = reference_forward_packed(x, packed).astype(jnp.float32)
    assert jnp.allclose(out_f32, ref_tight, atol=1e-2, rtol=1e-2), "mismatch vs packed reference"

    # Loose check vs faithful f32 module semantics (bf16 drift expected).
    ref_module = reference_forward_module(x, raw)
    assert jnp.allclose(out_f32, ref_module, atol=5e-2, rtol=5e-2), "mismatch vs module reference"

    print("KERNEL_OK")
</pallas_src>

<mosaic_0001>
module attributes {stable_mosaic.version = 11 : i64} {
  func.func @_mlp_kernel(%arg0: i32, %arg1: memref<16x32xf32, #tpu.memory_space<vmem>>, %arg2: memref<32x128xbf16, #tpu.memory_space<vmem>>, %arg3: memref<4x128x128xbf16, #tpu.memory_space<vmem>>, %arg4: memref<128x128xbf16, #tpu.memory_space<vmem>>, %arg5: memref<5x1x128xf32, #tpu.memory_space<vmem>>, %arg6: memref<1x128xf32, #tpu.memory_space<vmem>>, %arg7: memref<16x128xbf16, #tpu.memory_space<vmem>>) attributes {dimension_semantics = [#tpu.dimension_semantics<parallel>], iteration_bounds = array<i64: 1>, scalar_prefetch = 0 : i64, scratch_operands = 0 : i64, tpu.core_type = #tpu.core_type<tc>, window_params = [{transform_indices = @transform_0, window_bounds = array<i64: 16, 32>}, {pipeline_mode = #tpu.pipeline_mode<synchronous>, transform_indices = @transform_1, window_bounds = array<i64: 32, 128>}, {pipeline_mode = #tpu.pipeline_mode<synchronous>, transform_indices = @transform_2, window_bounds = array<i64: 4, 128, 128>}, {pipeline_mode = #tpu.pipeline_mode<synchronous>, transform_indices = @transform_3, window_bounds = array<i64: 128, 128>}, {pipeline_mode = #tpu.pipeline_mode<synchronous>, transform_indices = @transform_4, window_bounds = array<i64: 5, 1, 128>}, {pipeline_mode = #tpu.pipeline_mode<synchronous>, transform_indices = @transform_5, window_bounds = array<i64: 1, 128>}, {transform_indices = @transform_6, window_bounds = array<i64: 16, 128>}]} {
    %c0 = arith.constant 0 : index
    %c0_0 = arith.constant 0 : index
    %0 = vector.load %arg1[%c0, %c0_0] : memref<16x32xf32, #tpu.memory_space<vmem>>, vector<16x32xf32>
    %1 = arith.truncf %0 : vector<16x32xf32> to vector<16x32xbf16>
    %c0_1 = arith.constant 0 : index
    %c0_2 = arith.constant 0 : index
    %2 = vector.load %arg2[%c0_1, %c0_2] : memref<32x128xbf16, #tpu.memory_space<vmem>>, vector<32x128xbf16>
    %cst = arith.constant dense<0.000000e+00> : vector<16x128xf32>
    %3 = tpu.matmul %1, %2, %cst {dimension_numbers = #tpu.dot_dimension_numbers<[1], [0], [0], [1], [0, 0, 1, 1], [], []>} : vector<16x32xbf16>, vector<32x128xbf16>, vector<16x128xf32> -> vector<16x128xf32>
    %c0_3 = arith.constant 0 : index
    %c0_4 = arith.constant 0 : index
    %c0_5 = arith.constant 0 : index
    %4 = vector.load %arg5[%c0_3, %c0_4, %c0_5] : memref<5x1x128xf32, #tpu.memory_space<vmem>>, vector<1x1x128xf32>
    %5 = vector.shape_cast %4 : vector<1x1x128xf32> to vector<1x128xf32>
    %6 = vector.broadcast %5 : vector<1x128xf32> to vector<16x128xf32>
    %7 = arith.addf %3, %6 : vector<16x128xf32>
    %cst_6 = arith.constant 0.000000e+00 : f32
    %8 = vector.broadcast %cst_6 : f32 to vector<16x128xf32>
    %9 = arith.maximumf %7, %8 : vector<16x128xf32>
    %10 = arith.truncf %9 : vector<16x128xf32> to vector<16x128xbf16>
    %c0_7 = arith.constant 0 : index
    %c0_8 = arith.constant 0 : index
    %c0_9 = arith.constant 0 : index
    %11 = vector.load %arg3[%c0_7, %c0_8, %c0_9] : memref<4x128x128xbf16, #tpu.memory_space<vmem>>, vector<1x128x128xbf16>
    %12 = vector.shape_cast %11 : vector<1x128x128xbf16> to vector<128x128xbf16>
    %cst_10 = arith.constant dense<0.000000e+00> : vector<16x128xf32>
    %13 = tpu.matmul %10, %12, %cst_10 {dimension_numbers = #tpu.dot_dimension_numbers<[1], [0], [0], [1], [0, 0, 1, 1], [], []>} : vector<16x128xbf16>, vector<128x128xbf16>, vector<16x128xf32> -> vector<16x128xf32>
    %c1 = arith.constant 1 : index
    %c0_11 = arith.constant 0 : index
    %c0_12 = arith.constant 0 : index
    %14 = vector.load %arg5[%c1, %c0_11, %c0_12] : memref<5x1x128xf32, #tpu.memory_space<vmem>>, vector<1x1x128xf32>
    %15 = vector.shape_cast %14 : vector<1x1x128xf32> to vector<1x128xf32>
    %16 = vector.broadcast %15 : vector<1x128xf32> to vector<16x128xf32>
    %17 = arith.addf %13, %16 : vector<16x128xf32>
    %cst_13 = arith.constant 0.000000e+00 : f32
    %18 = vector.broadcast %cst_13 : f32 to vector<16x128xf32>
    %19 = arith.maximumf %17, %18 : vector<16x128xf32>
    %20 = arith.truncf %19 : vector<16x128xf32> to vector<16x128xbf16>
    %c1_14 = arith.constant 1 : index
    %c0_15 = arith.constant 0 : index
    %c0_16 = arith.constant 0 : index
    %21 = vector.load %arg3[%c1_14, %c0_15, %c0_16] : memref<4x128x128xbf16, #tpu.memory_space<vmem>>, vector<1x128x128xbf16>
    %22 = vector.shape_cast %21 : vector<1x128x128xbf16> to vector<128x128xbf16>
    %cst_17 = arith.constant dense<0.000000e+00> : vector<16x128xf32>
    %23 = tpu.matmul %20, %22, %cst_17 {dimension_numbers = #tpu.dot_dimension_numbers<[1], [0], [0], [1], [0, 0, 1, 1], [], []>} : vector<16x128xbf16>, vector<128x128xbf16>, vector<16x128xf32> -> vector<16x128xf32>
    %c2 = arith.constant 2 : index
    %c0_18 = arith.constant 0 : index
    %c0_19 = arith.constant 0 : index
    %24 = vector.load %arg5[%c2, %c0_18, %c0_19] : memref<5x1x128xf32, #tpu.memory_space<vmem>>, vector<1x1x128xf32>
    %25 = vector.shape_cast %24 : vector<1x1x128xf32> to vector<1x128xf32>
    %26 = vector.broadcast %25 : vector<1x128xf32> to vector<16x128xf32>
    %27 = arith.addf %23, %26 : vector<16x128xf32>
    %cst_20 = arith.constant 0.000000e+00 : f32
    %28 = vector.broadcast %cst_20 : f32 to vector<16x128xf32>
    %29 = arith.maximumf %27, %28 : vector<16x128xf32>
    %30 = arith.truncf %29 : vector<16x128xf32> to vector<16x128xbf16>
    %c2_21 = arith.constant 2 : index
    %c0_22 = arith.constant 0 : index
    %c0_23 = arith.constant 0 : index
    %31 = vector.load %arg3[%c2_21, %c0_22, %c0_23] : memref<4x128x128xbf16, #tpu.memory_space<vmem>>, vector<1x128x128xbf16>
    %32 = vector.shape_cast %31 : vector<1x128x128xbf16> to vector<128x128xbf16>
    %cst_24 = arith.constant dense<0.000000e+00> : vector<16x128xf32>
    %33 = tpu.matmul %30, %32, %cst_24 {dimension_numbers = #tpu.dot_dimension_numbers<[1], [0], [0], [1], [0, 0, 1, 1], [], []>} : vector<16x128xbf16>, vector<128x128xbf16>, vector<16x128xf32> -> vector<16x128xf32>
    %c3 = arith.constant 3 : index
    %c0_25 = arith.constant 0 : index
    %c0_26 = arith.constant 0 : index
    %34 = vector.load %arg5[%c3, %c0_25, %c0_26] : memref<5x1x128xf32, #tpu.memory_space<vmem>>, vector<1x1x128xf32>
    %35 = vector.shape_cast %34 : vector<1x1x128xf32> to vector<1x128xf32>
    %36 = vector.broadcast %35 : vector<1x128xf32> to vector<16x128xf32>
    %37 = arith.addf %33, %36 : vector<16x128xf32>
    %cst_27 = arith.constant 0.000000e+00 : f32
    %38 = vector.broadcast %cst_27 : f32 to vector<16x128xf32>
    %39 = arith.maximumf %37, %38 : vector<16x128xf32>
    %40 = arith.truncf %39 : vector<16x128xf32> to vector<16x128xbf16>
    %c3_28 = arith.constant 3 : index
    %c0_29 = arith.constant 0 : index
    %c0_30 = arith.constant 0 : index
    %41 = vector.load %arg3[%c3_28, %c0_29, %c0_30] : memref<4x128x128xbf16, #tpu.memory_space<vmem>>, vector<1x128x128xbf16>
    %42 = vector.shape_cast %41 : vector<1x128x128xbf16> to vector<128x128xbf16>
    %cst_31 = arith.constant dense<0.000000e+00> : vector<16x128xf32>
    %43 = tpu.matmul %40, %42, %cst_31 {dimension_numbers = #tpu.dot_dimension_numbers<[1], [0], [0], [1], [0, 0, 1, 1], [], []>} : vector<16x128xbf16>, vector<128x128xbf16>, vector<16x128xf32> -> vector<16x128xf32>
    %c4 = arith.constant 4 : index
    %c0_32 = arith.constant 0 : index
    %c0_33 = arith.constant 0 : index
    %44 = vector.load %arg5[%c4, %c0_32, %c0_33] : memref<5x1x128xf32, #tpu.memory_space<vmem>>, vector<1x1x128xf32>
    %45 = vector.shape_cast %44 : vector<1x1x128xf32> to vector<1x128xf32>
    %46 = vector.broadcast %45 : vector<1x128xf32> to vector<16x128xf32>
    %47 = arith.addf %43, %46 : vector<16x128xf32>
    %cst_34 = arith.constant 0.000000e+00 : f32
    %48 = vector.broadcast %cst_34 : f32 to vector<16x128xf32>
    %49 = arith.maximumf %47, %48 : vector<16x128xf32>
    %50 = arith.truncf %49 : vector<16x128xf32> to vector<16x128xbf16>
    %c0_35 = arith.constant 0 : index
    %c0_36 = arith.constant 0 : index
    %51 = vector.load %arg4[%c0_35, %c0_36] : memref<128x128xbf16, #tpu.memory_space<vmem>>, vector<128x128xbf16>
    %cst_37 = arith.constant dense<0.000000e+00> : vector<16x128xf32>
    %52 = tpu.matmul %50, %51, %cst_37 {dimension_numbers = #tpu.dot_dimension_numbers<[1], [0], [0], [1], [0, 0, 1, 1], [], []>} : vector<16x128xbf16>, vector<128x128xbf16>, vector<16x128xf32> -> vector<16x128xf32>
    %c0_38 = arith.constant 0 : index
    %c0_39 = arith.constant 0 : index
    %53 = vector.load %arg6[%c0_38, %c0_39] : memref<1x128xf32, #tpu.memory_space<vmem>>, vector<1x128xf32>
    %54 = vector.broadcast %53 : vector<1x128xf32> to vector<16x128xf32>
    %55 = arith.addf %52, %54 : vector<16x128xf32>
    %56 = arith.truncf %55 : vector<16x128xf32> to vector<16x128xbf16>
    %c0_40 = arith.constant 0 : index
    %c0_41 = arith.constant 0 : index
    %57 = vector.load %arg7[%c0_40, %c0_41] : memref<16x128xbf16, #tpu.memory_space<vmem>>, vector<16x128xbf16>
    tpu.vector_store %arg7[%c0_40, %c0_41], %56 {strides = array<i32>} : memref<16x128xbf16, #tpu.memory_space<vmem>>, vector<16x128xbf16>,
    return
  }
  func.func @transform_0(%arg0: i32) -> (i32, i32) {
    %c0_i32 = arith.constant 0 : i32
    %c0_i32_0 = arith.constant 0 : i32
    return %arg0, %c0_i32 : i32, i32
  }
  func.func @transform_1(%arg0: i32) -> (i32, i32) {
    %c0_i32 = arith.constant 0 : i32
    %c0_i32_0 = arith.constant 0 : i32
    %c0_i32_1 = arith.constant 0 : i32
    return %c0_i32, %c0_i32_0 : i32, i32
  }
  func.func @transform_2(%arg0: i32) -> (i32, i32, i32) {
    %c0_i32 = arith.constant 0 : i32
    %c0_i32_0 = arith.constant 0 : i32
    %c0_i32_1 = arith.constant 0 : i32
    %c0_i32_2 = arith.constant 0 : i32
    return %c0_i32, %c0_i32_0, %c0_i32_1 : i32, i32, i32
  }
  func.func @transform_3(%arg0: i32) -> (i32, i32) {
    %c0_i32 = arith.constant 0 : i32
    %c0_i32_0 = arith.constant 0 : i32
    %c0_i32_1 = arith.constant 0 : i32
    return %c0_i32, %c0_i32_0 : i32, i32
  }
  func.func @transform_4(%arg0: i32) -> (i32, i32, i32) {
    %c0_i32 = arith.constant 0 : i32
    %c0_i32_0 = arith.constant 0 : i32
    %c0_i32_1 = arith.constant 0 : i32
    %c0_i32_2 = arith.constant 0 : i32
    return %c0_i32, %c0_i32_0, %c0_i32_1 : i32, i32, i32
  }
  func.func @transform_5(%arg0: i32) -> (i32, i32) {
    %c0_i32 = arith.constant 0 : i32
    %c0_i32_0 = arith.constant 0 : i32
    %c0_i32_1 = arith.constant 0 : i32
    return %c0_i32, %c0_i32_0 : i32, i32
  }
  func.func @transform_6(%arg0: i32) -> (i32, i32) {
    %c0_i32 = arith.constant 0 : i32
    %c0_i32_0 = arith.constant 0 : i32
    return %arg0, %c0_i32 : i32, i32
  }
}

</mosaic_0001>

<llo_original>
// kernel: tpu_custom_call.1
$region0: #{tpu_custom_call.1}
  #allocation0 [shape = 'u32[]', space=smem, size = 0x4, offset = 0x4, fixed_abs, tag = 'smem constant byte address 0x4 - core index']
  #allocation1 [shape = 'u32[144,128]{1,0:T(1,128)}', space=vmem, size = 0x12000, scoped, tag = 'internal scratch']
  %s0 = inlined_call_operand.hbm [shape: f32[16,32], index: 0, kind: input, shape index: {}]
  %s1 = inlined_call_operand.hbm [shape: bf16[32,128], index: 1, kind: input, shape index: {}]
  %s2 = inlined_call_operand.hbm [shape: bf16[4,128,128], index: 2, kind: input, shape index: {}]
  %s3 = inlined_call_operand.hbm [shape: bf16[128,128], index: 3, kind: input, shape index: {}]
  %s4 = inlined_call_operand.vmem [shape: f32[5,1,128], index: 4, kind: input, shape index: {}]
  %s5 = inlined_call_operand.vmem [shape: f32[1,128], index: 5, kind: input, shape index: {}]
  %s6 = inlined_call_operand.hbm [shape: bf16[16,128], index: 6, kind: output, shape index: {}]
  %s7 = sld [smem:[#allocation0]]
  $region50: #{tpu_custom_call.1} parent=0
    _
  %s9 = ssub.s32 1, %s7
  %s10 = scalar_select 0, %s9, %s7
  $region1: #{tpu_custom_call.1} parent=0
    #allocation2 [shape = 'u8[8192]{0}', space=vmem, size = 0x2000, scoped, tag = 'input window, operand 0, single buffered']
    #allocation3 [shape = 's32[1]{0}', space=sflag, size = 0x4, scoped, tag = 'scoped memory for tpu_custom_call.1']
    #allocation4 [shape = 's32[1]{0}', space=sflag, size = 0x4, scoped, tag = 'scoped memory for tpu_custom_call.1']
    #allocation5 [shape = 'u8[8192]{0}', space=vmem, size = 0x2000, scoped, tag = 'input window, operand 1, single buffered']
    #allocation6 [shape = 's32[1]{0}', space=sflag, size = 0x4, scoped, tag = 'scoped memory for tpu_custom_call.1']
    #allocation7 [shape = 'u8[131072]{0}', space=vmem, size = 0x20000, scoped, tag = 'input window, operand 2, single buffered']
    #allocation8 [shape = 'u8[32768]{0}', space=vmem, size = 0x8000, scoped, tag = 'input window, operand 3, single buffered']
    #allocation9 [shape = 's32[1]{0}', space=sflag, size = 0x4, scoped, tag = 'scoped memory for tpu_custom_call.1']
    #allocation10 [shape = 'u8[4096]{0}', space=vmem, size = 0x1000, scoped, tag = 'output window, operand 0, single buffered']
    %11 = vsyncpa [#allocation3], 0
    %12 = vsyncpa [#allocation6], 0
    %13 = vsyncpa [#allocation9], 0
    %14 = vsyncpa [#allocation4], 0
    // Predicated region
    $region2: #{tpu_custom_call.1} parent=1 // pred_check
      _
    $region3: #{tpu_custom_call.1} parent=1 // pred_check_branch
      %16 = sbr.rel (0) target = $region5
    $region4: #{tpu_custom_call.1} parent=1 // pred_region
      %s18 = ssub.s32 256, 256
      %19 = vsyncadd [#allocation3], %s18
      %s20 = sshll.u32 [#allocation2], 4
      %s21 = int_to_ptr.vmem [resolvable:$true] %s20
      %26 = dma.hbm_to_vmem [thread:$0]  %s0, 256, %s21, [#allocation3], 128, 128, 8
    $region5: #{tpu_custom_call.1} parent=1 // pred_fallthru
      _
    // Predicated region
    $region6: #{tpu_custom_call.1} parent=1 // pred_check
      _
    $region7: #{tpu_custom_call.1} parent=1 // pred_check_branch
      %28 = sbr.rel (0) target = $region9
    $region8: #{tpu_custom_call.1} parent=1 // pred_region
      %s30 = ssub.s32 256, 256
      %31 = vsyncadd [#allocation6], %s30
      %s32 = sshll.u32 [#allocation5], 4
      %s33 = int_to_ptr.vmem [resolvable:$true] %s32
      %38 = dma.hbm_to_vmem [thread:$0]  %s1, 256, %s33, [#allocation6], 64, 64, 4
    $region9: #{tpu_custom_call.1} parent=1 // pred_fallthru
      _
    // Predicated region
    $region10: #{tpu_custom_call.1} parent=1 // pred_check
      _
    $region11: #{tpu_custom_call.1} parent=1 // pred_check_branch
      %40 = sbr.rel (0) target = $region13
    $region12: #{tpu_custom_call.1} parent=1 // pred_region
      %s42 = ssub.s32 4096, 4096
      %43 = vsyncadd [#allocation6], %s42
      %s44 = sshll.u32 [#allocation7], 4
      %s45 = int_to_ptr.vmem [resolvable:$true] %s44
      %50 = dma.hbm_to_vmem [thread:$0]  %s2, 4096, %s45, [#allocation6], 64, 64, 4
    $region13: #{tpu_custom_call.1} parent=1 // pred_fallthru
      _
    // Predicated region
    $region14: #{tpu_custom_call.1} parent=1 // pred_check
      _
    $region15: #{tpu_custom_call.1} parent=1 // pred_check_branch
      %52 = sbr.rel (0) target = $region17
    $region16: #{tpu_custom_call.1} parent=1 // pred_region
      %s54 = ssub.s32 1024, 1024
      %55 = vsyncadd [#allocation9], %s54
      %s56 = sshll.u32 [#allocation8], 4
      %s57 = int_to_ptr.vmem [resolvable:$true] %s56
      %62 = dma.hbm_to_vmem [thread:$0]  %s3, 1024, %s57, [#allocation9], 64, 64, 4
    $region17: #{tpu_custom_call.1} parent=1 // pred_fallthru
      _
    // Predicated region
    $region18: #{tpu_custom_call.1} parent=1 // pred_check
      _
    $region19: #{tpu_custom_call.1} parent=1 // pred_check_branch
      %64 = sbr.rel (0) target = $region21
    $region20: #{tpu_custom_call.1} parent=1 // pred_region
      _
    $region21: #{tpu_custom_call.1} parent=1 // pred_fallthru
      _
    // Predicated region
    $region22: #{tpu_custom_call.1} parent=1 // pred_check
      _
    $region23: #{tpu_custom_call.1} parent=1 // pred_check_branch
      %66 = sbr.rel (0) target = $region25
    $region24: #{tpu_custom_call.1} parent=1 // pred_region
      _
    $region25: #{tpu_custom_call.1} parent=1 // pred_fallthru
      _
    // Predicated region
    $region26: #{tpu_custom_call.1} parent=1 // pred_check
      _
    $region27: #{tpu_custom_call.1} parent=1 // pred_check_branch
      %68 = sbr.rel (0) target = $region29
    $region28: #{tpu_custom_call.1} parent=1 // pred_region
      %69 = dma.done [#allocation3], 256
    $region29: #{tpu_custom_call.1} parent=1 // pred_fallthru
      _
    // Predicated region
    $region30: #{tpu_custom_call.1} parent=1 // pred_check
      _
    $region31: #{tpu_custom_call.1} parent=1 // pred_check_branch
      %71 = sbr.rel (0) target = $region33
    $region32: #{tpu_custom_call.1} parent=1 // pred_region
      %72 = dma.done [#allocation6], 256
    $region33: #{tpu_custom_call.1} parent=1 // pred_fallthru
      _
    // Predicated region
    $region34: #{tpu_custom_call.1} parent=1 // pred_check
      _
    $region35: #{tpu_custom_call.1} parent=1 // pred_check_branch
      %74 = sbr.rel (0) target = $region37
    $region36: #{tpu_custom_call.1} parent=1 // pred_region
      %75 = dma.done [#allocation6], 4096
    $region37: #{tpu_custom_call.1} parent=1 // pred_fallthru
      _
    // Predicated region
    $region38: #{tpu_custom_call.1} parent=1 // pred_check
      _
    $region39: #{tpu_custom_call.1} parent=1 // pred_check_branch
      %77 = sbr.rel (0) target = $region41
    $region40: #{tpu_custom_call.1} parent=1 // pred_region
      %78 = dma.done [#allocation9], 1024
    $region41: #{tpu_custom_call.1} parent=1 // pred_fallthru
      _
    %v80 = vld [vmem:[#allocation2] sm:$0xff]
    %v81 = vld [vmem:[#allocation2 + $0x8] sm:$0xff]
    %v82 = vpack.c.bf16 %v81, %v80
    %v83 = vld [vmem:[#allocation5] sm:$0xf]
    %v84 = vld [vmem:[#allocation5 + $0x4] sm:$0xf]
    %v85 = vld [vmem:[#allocation5 + $0x8] sm:$0xf]
    %v86 = vld [vmem:[#allocation5 + $0xc] sm:$0xf]
    %v87 = vld [vmem:[%s4] sm:$0x1]
    %v89 = vlaneseq
    %v90 = vshrl.u32 %v89, 7
    %v91 = vsub.s32 0, %v90
    %v92 = vrot.slane %v87, %v91
    %v98 = vunpack.c.l.b16 %v83
    %v99 = vunpack.c.l.b16 %v84
    %v100 = vunpack.c.l.b16 %v85
    %v101 = vunpack.c.l.b16 %v86
    %v102 = vpack.c.b16 %v99, %v98
    %v103 = vpack.c.b16 %v101, %v100
    %vm106 = vcmask 261120
    %v108 = vsel %vm106, %v82, 0
    %110 = vmatprep.subr.bf16.mxu0 0
    %111 = vmatpush1.bf16.msra.mxu0 0
    %112 = vmatprep.subr.bf16.mxu0 0
    %113 = vmatpush1.bf16.msra.mxu0 0
    %114 = vmatprep.subr.bf16.mxu0 0
    %115 = vmatpush1.bf16.msra.mxu0 0
    %116 = vmatprep.subr.bf16.mxu0 0
    %117 = vmatpush1.bf16.msra.mxu0 0
    %118 = vmatprep.subr.bf16.mxu0 0
    %119 = vmatpush1.bf16.msra.mxu0 0
    %120 = vmatprep.subr.bf16.mxu0 0
    %121 = vmatpush1.bf16.msra.mxu0 0
    %122 = vmatprep.subr.bf16.mxu0 0
    %123 = vmatpush1.bf16.msra.mxu0 %v103
    %124 = vmatprep.subr.bf16.mxu0 0
    %125 = vmatpush1.bf16.msra.mxu0 %v102
    %126 = vmatprep.subr.bf16.mxu0 0
    %127 = vmatpush2.bf16.msra.mxu0 0
    %128 = vmatprep.subr.bf16.mxu0 0
    %129 = vmatpush2.bf16.msra.mxu0 0
    %130 = vmatprep.subr.bf16.mxu0 0
    %131 = vmatpush2.bf16.msra.mxu0 0
    %132 = vmatprep.subr.bf16.mxu0 0
    %133 = vmatpush2.bf16.msra.mxu0 0
    %134 = vmatprep.subr.bf16.mxu0 0
    %135 = vmatpush2.bf16.msra.mxu0 0
    %136 = vmatprep.subr.bf16.mxu0 0
    %137 = vmatpush2.bf16.msra.mxu0 0
    %138 = vmatprep.subr.bf16.mxu0 0
    %139 = vmatpush2.bf16.msra.mxu0 0
    %140 = vmatprep.subr.bf16.mxu0 0
    %141 = vmatpush2.bf16.msra.mxu0 0
    %142 = vmatprep.mubr.bf16.mxu0 0
    %143 = vmatmul.mubr.bf16.gmra.mxu0 %v108
    %v144 = vpop.f32.mrf.mxu0
    %v145 = vadd.f32 %v92, %v144
    %v146 = vpop.f32.mrf.mxu0
    %v147 = vpop.f32.mrf.mxu0
    %v148 = vadd.f32 %v92, %v147
    %v149 = vpop.f32.mrf.mxu0
    %150 = vdwg.mxu0
    %v151 = vmax.f32 %v145, 0.0
    %v152 = vmax.f32 %v148, 0.0
    %v153 = vpack.c.bf16 %v152, %v151
    %v154 = vld [vmem:[#allocation7] sm:$0xf]
    %v155 = vld [vmem:[#allocation7 + $0x4] sm:$0xf]
    %v156 = vld [vmem:[#allocation7 + $0x8] sm:$0xf]
    %v157 = vld [vmem:[#allocation7 + $0xc] sm:$0xf]
    %v158 = vld [vmem:[#allocation7 + $0x10] sm:$0xf]
    %v159 = vld [vmem:[#allocation7 + $0x14] sm:$0xf]
    %v160 = vld [vmem:[#allocation7 + $0x18] sm:$0xf]
    %v161 = vld [vmem:[#allocation7 + $0x1c] sm:$0xf]
    %v162 = vld [vmem:[#allocation7 + $0x20] sm:$0xf]
    %v163 = vld [vmem:[#allocation7 + $0x24] sm:$0xf]
    %v164 = vld [vmem:[#allocation7 + $0x28] sm:$0xf]
    %v165 = vld [vmem:[#allocation7 + $0x2c] sm:$0xf]
    %v166 = vld [vmem:[#allocation7 + $0x30] sm:$0xf]
    %v167 = vld [vmem:[#allocation7 + $0x34] sm:$0xf]
    %v168 = vld [vmem:[#allocation7 + $0x38] sm:$0xf]
    %v169 = vld [vmem:[#allocation7 + $0x3c] sm:$0xf]
    %s170 = scalar_lea.vmem %s4, 1
    %v171 = vld [vmem:[%s170] sm:$0x1]
    %v173 = vlaneseq
    %v174 = vshrl.u32 %v173, 7
    %v175 = vsub.s32 0, %v174
    %v176 = vrot.slane %v171, %v175
    %v194 = vunpack.c.l.b16 %v154
    %v195 = vunpack.c.l.b16 %v155
    %v196 = vunpack.c.l.b16 %v156
    %v197 = vunpack.c.l.b16 %v157
    %v198 = vunpack.c.l.b16 %v158
    %v199 = vunpack.c.l.b16 %v159
    %v200 = vunpack.c.l.b16 %v160
    %v201 = vunpack.c.l.b16 %v161
    %v202 = vunpack.c.l.b16 %v162
    %v203 = vunpack.c.l.b16 %v163
    %v204 = vunpack.c.l.b16 %v164
    %v205 = vunpack.c.l.b16 %v165
    %v206 = vunpack.c.l.b16 %v166
    %v207 = vunpack.c.l.b16 %v167
    %v208 = vunpack.c.l.b16 %v168
    %v209 = vunpack.c.l.b16 %v169
    %v210 = vpack.c.b16 %v195, %v194
    %v211 = vpack.c.b16 %v197, %v196
    %v212 = vpack.c.b16 %v199, %v198
    %v213 = vpack.c.b16 %v201, %v200
    %v214 = vpack.c.b16 %v203, %v202
    %v215 = vpack.c.b16 %v205, %v204
    %v216 = vpack.c.b16 %v207, %v206
    %v217 = vpack.c.b16 %v209, %v208
    %226 = vmatprep.subr.bf16.mxu0 0
    %227 = vmatpush1.bf16.msra.mxu0 %v217
    %228 = vmatprep.subr.bf16.mxu0 0
    %229 = vmatpush1.bf16.msra.mxu0 %v216
    %230 = vmatprep.subr.bf16.mxu0 0
    %231 = vmatpush1.bf16.msra.mxu0 %v215
    %232 = vmatprep.subr.bf16.mxu0 0
    %233 = vmatpush1.bf16.msra.mxu0 %v214
    %234 = vmatprep.subr.bf16.mxu0 0
    %235 = vmatpush1.bf16.msra.mxu0 %v213
    %236 = vmatprep.subr.bf16.mxu0 0
    %237 = vmatpush1.bf16.msra.mxu0 %v212
    %238 = vmatprep.subr.bf16.mxu0 0
    %239 = vmatpush1.bf16.msra.mxu0 %v211
    %240 = vmatprep.subr.bf16.mxu0 0
    %241 = vmatpush1.bf16.msra.mxu0 %v210
    %242 = vmatprep.subr.bf16.mxu0 0
    %243 = vmatpush2.bf16.msra.mxu0 0
    %244 = vmatprep.subr.bf16.mxu0 0
    %245 = vmatpush2.bf16.msra.mxu0 0
    %246 = vmatprep.subr.bf16.mxu0 0
    %247 = vmatpush2.bf16.msra.mxu0 0
    %248 = vmatprep.subr.bf16.mxu0 0
    %249 = vmatpush2.bf16.msra.mxu0 0
    %250 = vmatprep.subr.bf16.mxu0 0
    %251 = vmatpush2.bf16.msra.mxu0 0
    %252 = vmatprep.subr.bf16.mxu0 0
    %253 = vmatpush2.bf16.msra.mxu0 0
    %254 = vmatprep.subr.bf16.mxu0 0
    %255 = vmatpush2.bf16.msra.mxu0 0
    %256 = vmatprep.subr.bf16.mxu0 0
    %257 = vmatpush2.bf16.msra.mxu0 0
    %258 = vmatprep.mubr.bf16.mxu0 0
    %259 = vmatmul.mubr.bf16.gmra.mxu0 %v153
    %v260 = vpop.f32.mrf.mxu0
    %v261 = vadd.f32 %v176, %v260
    %v262 = vpop.f32.mrf.mxu0
    %v263 = vpop.f32.mrf.mxu0
    %v264 = vadd.f32 %v176, %v263
    %v265 = vpop.f32.mrf.mxu0
    %266 = vdwg.mxu0
    %v267 = vmax.f32 %v261, 0.0
    %v268 = vmax.f32 %v264, 0.0
    %v269 = vpack.c.bf16 %v268, %v267
    %s270 = scalar_lea.vmem [#allocation7], 64
    %v271 = vld [vmem:[%s270] sm:$0xf]
    %v272 = vld [vmem:[%s270 + $0x4] sm:$0xf]
    %v273 = vld [vmem:[%s270 + $0x8] sm:$0xf]
    %v274 = vld [vmem:[%s270 + $0xc] sm:$0xf]
    %v275 = vld [vmem:[%s270 + $0x10] sm:$0xf]
    %v276 = vld [vmem:[%s270 + $0x14] sm:$0xf]
    %v277 = vld [vmem:[%s270 + $0x18] sm:$0xf]
    %v278 = vld [vmem:[%s270 + $0x1c] sm:$0xf]
    %v279 = vld [vmem:[%s270 + $0x20] sm:$0xf]
    %v280 = vld [vmem:[%s270 + $0x24] sm:$0xf]
    %v281 = vld [vmem:[%s270 + $0x28] sm:$0xf]
    %v282 = vld [vmem:[%s270 + $0x2c] sm:$0xf]
    %v283 = vld [vmem:[%s270 + $0x30] sm:$0xf]
    %v284 = vld [vmem:[%s270 + $0x34] sm:$0xf]
    %v285 = vld [vmem:[%s270 + $0x38] sm:$0xf]
    %v286 = vld [vmem:[%s270 + $0x3c] sm:$0xf]
    %s287 = scalar_lea.vmem %s4, 2
    %v288 = vld [vmem:[%s287] sm:$0x1]
    %v290 = vlaneseq
    %v291 = vshrl.u32 %v290, 7
    %v292 = vsub.s32 0, %v291
    %v293 = vrot.slane %v288, %v292
    %v311 = vunpack.c.l.b16 %v271
    %v312 = vunpack.c.l.b16 %v272
    %v313 = vunpack.c.l.b16 %v273
    %v314 = vunpack.c.l.b16 %v274
    %v315 = vunpack.c.l.b16 %v275
    %v316 = vunpack.c.l.b16 %v276
    %v317 = vunpack.c.l.b16 %v277
    %v318 = vunpack.c.l.b16 %v278
    %v319 = vunpack.c.l.b16 %v279
    %v320 = vunpack.c.l.b16 %v280
    %v321 = vunpack.c.l.b16 %v281
    %v322 = vunpack.c.l.b16 %v282
    %v323 = vunpack.c.l.b16 %v283
    %v324 = vunpack.c.l.b16 %v284
    %v325 = vunpack.c.l.b16 %v285
    %v326 = vunpack.c.l.b16 %v286
    %v327 = vpack.c.b16 %v312, %v311
    %v328 = vpack.c.b16 %v314, %v313
    %v329 = vpack.c.b16 %v316, %v315
    %v330 = vpack.c.b16 %v318, %v317
    %v331 = vpack.c.b16 %v320, %v319
    %v332 = vpack.c.b16 %v322, %v321
    %v333 = vpack.c.b16 %v324, %v323
    %v334 = vpack.c.b16 %v326, %v325
    %343 = vmatprep.subr.bf16.mxu0 0
    %344 = vmatpush1.bf16.msra.mxu0 %v334
    %345 = vmatprep.subr.bf16.mxu0 0
    %346 = vmatpush1.bf16.msra.mxu0 %v333
    %347 = vmatprep.subr.bf16.mxu0 0
    %348 = vmatpush1.bf16.msra.mxu0 %v332
    %349 = vmatprep.subr.bf16.mxu0 0
    %350 = vmatpush1.bf16.msra.mxu0 %v331
    %351 = vmatprep.subr.bf16.mxu0 0
    %352 = vmatpush1.bf16.msra.mxu0 %v330
    %353 = vmatprep.subr.bf16.mxu0 0
    %354 = vmatpush1.bf16.msra.mxu0 %v329
    %355 = vmatprep.subr.bf16.mxu0 0
    %356 = vmatpush1.bf16.msra.mxu0 %v328
    %357 = vmatprep.subr.bf16.mxu0 0
    %358 = vmatpush1.bf16.msra.mxu0 %v327
    %359 = vmatprep.subr.bf16.mxu0 0
    %360 = vmatpush2.bf16.msra.mxu0 0
    %361 = vmatprep.subr.bf16.mxu0 0
    %362 = vmatpush2.bf16.msra.mxu0 0
    %363 = vmatprep.subr.bf16.mxu0 0
    %364 = vmatpush2.bf16.msra.mxu0 0
    %365 = vmatprep.subr.bf16.mxu0 0
    %366 = vmatpush2.bf16.msra.mxu0 0
    %367 = vmatprep.subr.bf16.mxu0 0
    %368 = vmatpush2.bf16.msra.mxu0 0
    %369 = vmatprep.subr.bf16.mxu0 0
    %370 = vmatpush2.bf16.msra.mxu0 0
    %371 = vmatprep.subr.bf16.mxu0 0
    %372 = vmatpush2.bf16.msra.mxu0 0
    %373 = vmatprep.subr.bf16.mxu0 0
    %374 = vmatpush2.bf16.msra.mxu0 0
    %375 = vmatprep.mubr.bf16.mxu0 0
    %376 = vmatmul.mubr.bf16.gmra.mxu0 %v269
    %v377 = vpop.f32.mrf.mxu0
    %v378 = vadd.f32 %v293, %v377
    %v379 = vpop.f32.mrf.mxu0
    %v380 = vpop.f32.mrf.mxu0
    %v381 = vadd.f32 %v293, %v380
    %v382 = vpop.f32.mrf.mxu0
    %383 = vdwg.mxu0
    %v384 = vmax.f32 %v378, 0.0
    %v385 = vmax.f32 %v381, 0.0
    %v386 = vpack.c.bf16 %v385, %v384
    %s387 = scalar_lea.vmem [#allocation7], 128
    %v388 = vld [vmem:[%s387] sm:$0xf]
    %v389 = vld [vmem:[%s387 + $0x4] sm:$0xf]
    %v390 = vld [vmem:[%s387 + $0x8] sm:$0xf]
    %v391 = vld [vmem:[%s387 + $0xc] sm:$0xf]
    %v392 = vld [vmem:[%s387 + $0x10] sm:$0xf]
    %v393 = vld [vmem:[%s387 + $0x14] sm:$0xf]
    %v394 = vld [vmem:[%s387 + $0x18] sm:$0xf]
    %v395 = vld [vmem:[%s387 + $0x1c] sm:$0xf]
    %v396 = vld [vmem:[%s387 + $0x20] sm:$0xf]
    %v397 = vld [vmem:[%s387 + $0x24] sm:$0xf]
    %v398 = vld [vmem:[%s387 + $0x28] sm:$0xf]
    %v399 = vld [vmem:[%s387 + $0x2c] sm:$0xf]
    %v400 = vld [vmem:[%s387 + $0x30] sm:$0xf]
    %v401 = vld [vmem:[%s387 + $0x34] sm:$0xf]
    %v402 = vld [vmem:[%s387 + $0x38] sm:$0xf]
    %v403 = vld [vmem:[%s387 + $0x3c] sm:$0xf]
    %s404 = scalar_lea.vmem %s4, 3
    %v405 = vld [vmem:[%s404] sm:$0x1]
    %v407 = vlaneseq
    %v408 = vshrl.u32 %v407, 7
    %v409 = vsub.s32 0, %v408
    %v410 = vrot.slane %v405, %v409
    %v428 = vunpack.c.l.b16 %v388
    %v429 = vunpack.c.l.b16 %v389
    %v430 = vunpack.c.l.b16 %v390
    %v431 = vunpack.c.l.b16 %v391
    %v432 = vunpack.c.l.b16 %v392
    %v433 = vunpack.c.l.b16 %v393
    %v434 = vunpack.c.l.b16 %v394
    %v435 = vunpack.c.l.b16 %v395
    %v436 = vunpack.c.l.b16 %v396
    %v437 = vunpack.c.l.b16 %v397
    %v438 = vunpack.c.l.b16 %v398
    %v439 = vunpack.c.l.b16 %v399
    %v440 = vunpack.c.l.b16 %v400
    %v441 = vunpack.c.l.b16 %v401
    %v442 = vunpack.c.l.b16 %v402
    %v443 = vunpack.c.l.b16 %v403
    %v444 = vpack.c.b16 %v429, %v428
    %v445 = vpack.c.b16 %v431, %v430
    %v446 = vpack.c.b16 %v433, %v432
    %v447 = vpack.c.b16 %v435, %v434
    %v448 = vpack.c.b16 %v437, %v436
    %v449 = vpack.c.b16 %v439, %v438
    %v450 = vpack.c.b16 %v441, %v440
    %v451 = vpack.c.b16 %v443, %v442
    %460 = vmatprep.subr.bf16.mxu0 0
    %461 = vmatpush1.bf16.msra.mxu0 %v451
    %462 = vmatprep.subr.bf16.mxu0 0
    %463 = vmatpush1.bf16.msra.mxu0 %v450
    %464 = vmatprep.subr.bf16.mxu0 0
    %465 = vmatpush1.bf16.msra.mxu0 %v449
    %466 = vmatprep.subr.bf16.mxu0 0
    %467 = vmatpush1.bf16.msra.mxu0 %v448
    %468 = vmatprep.subr.bf16.mxu0 0
    %469 = vmatpush1.bf16.msra.mxu0 %v447
    %470 = vmatprep.subr.bf16.mxu0 0
    %471 = vmatpush1.bf16.msra.mxu0 %v446
    %472 = vmatprep.subr.bf16.mxu0 0
    %473 = vmatpush1.bf16.msra.mxu0 %v445
    %474 = vmatprep.subr.bf16.mxu0 0
    %475 = vmatpush1.bf16.msra.mxu0 %v444
    %476 = vmatprep.subr.bf16.mxu0 0
    %477 = vmatpush2.bf16.msra.mxu0 0
    %478 = vmatprep.subr.bf16.mxu0 0
    %479 = vmatpush2.bf16.msra.mxu0 0
    %480 = vmatprep.subr.bf16.mxu0 0
    %481 = vmatpush2.bf16.msra.mxu0 0
    %482 = vmatprep.subr.bf16.mxu0 0
    %483 = vmatpush2.bf16.msra.mxu0 0
    %484 = vmatprep.subr.bf16.mxu0 0
    %485 = vmatpush2.bf16.msra.mxu0 0
    %486 = vmatprep.subr.bf16.mxu0 0
    %487 = vmatpush2.bf16.msra.mxu0 0
    %488 = vmatprep.subr.bf16.mxu0 0
    %489 = vmatpush2.bf16.msra.mxu0 0
    %490 = vmatprep.subr.bf16.mxu0 0
    %491 = vmatpush2.bf16.msra.mxu0 0
    %492 = vmatprep.mubr.bf16.mxu0 0
    %493 = vmatmul.mubr.bf16.gmra.mxu0 %v386
    %v494 = vpop.f32.mrf.mxu0
    %v495 = vadd.f32 %v410, %v494
    %v496 = vpop.f32.mrf.mxu0
    %v497 = vpop.f32.mrf.mxu0
    %v498 = vadd.f32 %v410, %v497
    %v499 = vpop.f32.mrf.mxu0
    %500 = vdwg.mxu0
    %v501 = vmax.f32 %v495, 0.0
    %v502 = vmax.f32 %v498, 0.0
    %v503 = vpack.c.bf16 %v502, %v501
    %s504 = scalar_lea.vmem [#allocation7], 192
    %v505 = vld [vmem:[%s504] sm:$0xf]
    %v506 = vld [vmem:[%s504 + $0x4] sm:$0xf]
    %v507 = vld [vmem:[%s504 + $0x8] sm:$0xf]
    %v508 = vld [vmem:[%s504 + $0xc] sm:$0xf]
    %v509 = vld [vmem:[%s504 + $0x10] sm:$0xf]
    %v510 = vld [vmem:[%s504 + $0x14] sm:$0xf]
    %v511 = vld [vmem:[%s504 + $0x18] sm:$0xf]
    %v512 = vld [vmem:[%s504 + $0x1c] sm:$0xf]
    %v513 = vld [vmem:[%s504 + $0x20] sm:$0xf]
    %v514 = vld [vmem:[%s504 + $0x24] sm:$0xf]
    %v515 = vld [vmem:[%s504 + $0x28] sm:$0xf]
    %v516 = vld [vmem:[%s504 + $0x2c] sm:$0xf]
    %v517 = vld [vmem:[%s504 + $0x30] sm:$0xf]
    %v518 = vld [vmem:[%s504 + $0x34] sm:$0xf]
    %v519 = vld [vmem:[%s504 + $0x38] sm:$0xf]
    %v520 = vld [vmem:[%s504 + $0x3c] sm:$0xf]
    %s521 = scalar_lea.vmem %s4, 4
    %v522 = vld [vmem:[%s521] sm:$0x1]
    %v524 = vlaneseq
    %v525 = vshrl.u32 %v524, 7
    %v526 = vsub.s32 0, %v525
    %v527 = vrot.slane %v522, %v526
    %v545 = vunpack.c.l.b16 %v505
    %v546 = vunpack.c.l.b16 %v506
    %v547 = vunpack.c.l.b16 %v507
    %v548 = vunpack.c.l.b16 %v508
    %v549 = vunpack.c.l.b16 %v509
    %v550 = vunpack.c.l.b16 %v510
    %v551 = vunpack.c.l.b16 %v511
    %v552 = vunpack.c.l.b16 %v512
    %v553 = vunpack.c.l.b16 %v513
    %v554 = vunpack.c.l.b16 %v514
    %v555 = vunpack.c.l.b16 %v515
    %v556 = vunpack.c.l.b16 %v516
    %v557 = vunpack.c.l.b16 %v517
    %v558 = vunpack.c.l.b16 %v518
    %v559 = vunpack.c.l.b16 %v519
    %v560 = vunpack.c.l.b16 %v520
    %v561 = vpack.c.b16 %v546, %v545
    %v562 = vpack.c.b16 %v548, %v547
    %v563 = vpack.c.b16 %v550, %v549
    %v564 = vpack.c.b16 %v552, %v551
    %v565 = vpack.c.b16 %v554, %v553
    %v566 = vpack.c.b16 %v556, %v555
    %v567 = vpack.c.b16 %v558, %v557
    %v568 = vpack.c.b16 %v560, %v559
    %577 = vmatprep.subr.bf16.mxu0 0
    %578 = vmatpush1.bf16.msra.mxu0 %v568
    %579 = vmatprep.subr.bf16.mxu0 0
    %580 = vmatpush1.bf16.msra.mxu0 %v567
    %581 = vmatprep.subr.bf16.mxu0 0
    %582 = vmatpush1.bf16.msra.mxu0 %v566
    %583 = vmatprep.subr.bf16.mxu0 0
    %584 = vmatpush1.bf16.msra.mxu0 %v565
    %585 = vmatprep.subr.bf16.mxu0 0
    %586 = vmatpush1.bf16.msra.mxu0 %v564
    %587 = vmatprep.subr.bf16.mxu0 0
    %588 = vmatpush1.bf16.msra.mxu0 %v563
    %589 = vmatprep.subr.bf16.mxu0 0
    %590 = vmatpush1.bf16.msra.mxu0 %v562
    %591 = vmatprep.subr.bf16.mxu0 0
    %592 = vmatpush1.bf16.msra.mxu0 %v561
    %593 = vmatprep.subr.bf16.mxu0 0
    %594 = vmatpush2.bf16.msra.mxu0 0
    %595 = vmatprep.subr.bf16.mxu0 0
    %596 = vmatpush2.bf16.msra.mxu0 0
    %597 = vmatprep.subr.bf16.mxu0 0
    %598 = vmatpush2.bf16.msra.mxu0 0
    %599 = vmatprep.subr.bf16.mxu0 0
    %600 = vmatpush2.bf16.msra.mxu0 0
    %601 = vmatprep.subr.bf16.mxu0 0
    %602 = vmatpush2.bf16.msra.mxu0 0
    %603 = vmatprep.subr.bf16.mxu0 0
    %604 = vmatpush2.bf16.msra.mxu0 0
    %605 = vmatprep.subr.bf16.mxu0 0
    %606 = vmatpush2.bf16.msra.mxu0 0
    %607 = vmatprep.subr.bf16.mxu0 0
    %608 = vmatpush2.bf16.msra.mxu0 0
    %609 = vmatprep.mubr.bf16.mxu0 0
    %610 = vmatmul.mubr.bf16.gmra.mxu0 %v503
    %v611 = vpop.f32.mrf.mxu0
    %v612 = vadd.f32 %v527, %v611
    %v613 = vpop.f32.mrf.mxu0
    %v614 = vpop.f32.mrf.mxu0
    %v615 = vadd.f32 %v527, %v614
    %v616 = vpop.f32.mrf.mxu0
    %617 = vdwg.mxu0
    %v618 = vmax.f32 %v612, 0.0
    %v619 = vmax.f32 %v615, 0.0
    %v620 = vpack.c.bf16 %v619, %v618
    %v621 = vld [vmem:[#allocation8] sm:$0xf]
    %v622 = vld [vmem:[#allocation8 + $0x4] sm:$0xf]
    %v623 = vld [vmem:[#allocation8 + $0x8] sm:$0xf]
    %v624 = vld [vmem:[#allocation8 + $0xc] sm:$0xf]
    %v625 = vld [vmem:[#allocation8 + $0x10] sm:$0xf]
    %v626 = vld [vmem:[#allocation8 + $0x14] sm:$0xf]
    %v627 = vld [vmem:[#allocation8 + $0x18] sm:$0xf]
    %v628 = vld [vmem:[#allocation8 + $0x1c] sm:$0xf]
    %v629 = vld [vmem:[#allocation8 + $0x20] sm:$0xf]
    %v630 = vld [vmem:[#allocation8 + $0x24] sm:$0xf]
    %v631 = vld [vmem:[#allocation8 + $0x28] sm:$0xf]
    %v632 = vld [vmem:[#allocation8 + $0x2c] sm:$0xf]
    %v633 = vld [vmem:[#allocation8 + $0x30] sm:$0xf]
    %v634 = vld [vmem:[#allocation8 + $0x34] sm:$0xf]
    %v635 = vld [vmem:[#allocation8 + $0x38] sm:$0xf]
    %v636 = vld [vmem:[#allocation8 + $0x3c] sm:$0xf]
    %v637 = vld [vmem:[%s5] sm:$0x1]
    %v639 = vlaneseq
    %v640 = vshrl.u32 %v639, 7
    %v641 = vsub.s32 0, %v640
    %v642 = vrot.slane %v637, %v641
    %v660 = vunpack.c.l.b16 %v621
    %v661 = vunpack.c.l.b16 %v622
    %v662 = vunpack.c.l.b16 %v623
    %v663 = vunpack.c.l.b16 %v624
    %v664 = vunpack.c.l.b16 %v625
    %v665 = vunpack.c.l.b16 %v626
    %v666 = vunpack.c.l.b16 %v627
    %v667 = vunpack.c.l.b16 %v628
    %v668 = vunpack.c.l.b16 %v629
    %v669 = vunpack.c.l.b16 %v630
    %v670 = vunpack.c.l.b16 %v631
    %v671 = vunpack.c.l.b16 %v632
    %v672 = vunpack.c.l.b16 %v633
    %v673 = vunpack.c.l.b16 %v634
    %v674 = vunpack.c.l.b16 %v635
    %v675 = vunpack.c.l.b16 %v636
    %v676 = vpack.c.b16 %v661, %v660
    %v677 = vpack.c.b16 %v663, %v662
    %v678 = vpack.c.b16 %v665, %v664
    %v679 = vpack.c.b16 %v667, %v666
    %v680 = vpack.c.b16 %v669, %v668
    %v681 = vpack.c.b16 %v671, %v670
    %v682 = vpack.c.b16 %v673, %v672
    %v683 = vpack.c.b16 %v675, %v674
    %692 = vmatprep.subr.bf16.mxu0 0
    %693 = vmatpush1.bf16.msra.mxu0 %v683
    %694 = vmatprep.subr.bf16.mxu0 0
    %695 = vmatpush1.bf16.msra.mxu0 %v682
    %696 = vmatprep.subr.bf16.mxu0 0
    %697 = vmatpush1.bf16.msra.mxu0 %v681
    %698 = vmatprep.subr.bf16.mxu0 0
    %699 = vmatpush1.bf16.msra.mxu0 %v680
    %700 = vmatprep.subr.bf16.mxu0 0
    %701 = vmatpush1.bf16.msra.mxu0 %v679
    %702 = vmatprep.subr.bf16.mxu0 0
    %703 = vmatpush1.bf16.msra.mxu0 %v678
    %704 = vmatprep.subr.bf16.mxu0 0
    %705 = vmatpush1.bf16.msra.mxu0 %v677
    %706 = vmatprep.subr.bf16.mxu0 0
    %707 = vmatpush1.bf16.msra.mxu0 %v676
    %708 = vmatprep.subr.bf16.mxu0 0
    %709 = vmatpush2.bf16.msra.mxu0 0
    %710 = vmatprep.subr.bf16.mxu0 0
    %711 = vmatpush2.bf16.msra.mxu0 0
    %712 = vmatprep.subr.bf16.mxu0 0
    %713 = vmatpush2.bf16.msra.mxu0 0
    %714 = vmatprep.subr.bf16.mxu0 0
    %715 = vmatpush2.bf16.msra.mxu0 0
    %716 = vmatprep.subr.bf16.mxu0 0
    %717 = vmatpush2.bf16.msra.mxu0 0
    %718 = vmatprep.subr.bf16.mxu0 0
    %719 = vmatpush2.bf16.msra.mxu0 0
    %720 = vmatprep.subr.bf16.mxu0 0
    %721 = vmatpush2.bf16.msra.mxu0 0
    %722 = vmatprep.subr.bf16.mxu0 0
    %723 = vmatpush2.bf16.msra.mxu0 0
    %724 = vmatprep.mubr.bf16.mxu0 0
    %725 = vmatmul.mubr.bf16.gmra.mxu0 %v620
    %v726 = vpop.f32.mrf.mxu0
    %v727 = vadd.f32 %v642, %v726
    %v728 = vpop.f32.mrf.mxu0
    %v729 = vpop.f32.mrf.mxu0
    %v730 = vadd.f32 %v642, %v729
    %v731 = vpop.f32.mrf.mxu0
    %732 = vdwg.mxu0
    %v733 = vpack.c.bf16 %v730, %v727
    %v735 = vunpack.c.l.b16 %v733
    %v736 = vunpack.c.h.b16 %v733
    %v737 = vpack.c.b16 %v735, %v735
    %v738 = vpack.c.b16 %v736, %v736
    %741 = vst [vmem:[#allocation10] sm:$0xf] %v737
    %742 = vst [vmem:[#allocation10 + $0x4] sm:$0xf] %v738
    // Predicated region
    $region42: #{tpu_custom_call.1} parent=1 // pred_check
      _
    $region43: #{tpu_custom_call.1} parent=1 // pred_check_branch
      %744 = sbr.rel (0) target = $region45
    $region44: #{tpu_custom_call.1} parent=1 // pred_region
      %s746 = ssub.s32 128, 128
      %747 = vsyncadd [#allocation4], %s746
      %s748 = sshll.u32 [#allocation10], 4
      %s749 = int_to_ptr.vmem [resolvable:$true] %s748
      %754 = dma.vmem_to_hbm [thread:$0]  %s749, 128, %s6, [#allocation4], 64, 64, 4
    $region45: #{tpu_custom_call.1} parent=1 // pred_fallthru
      _
    // Predicated region
    $region46: #{tpu_custom_call.1} parent=1 // pred_check
      _
    $region47: #{tpu_custom_call.1} parent=1 // pred_check_branch
      %756 = sbr.rel (0) target = $region49
    $region48: #{tpu_custom_call.1} parent=1 // pred_region
      %757 = dma.done [#allocation4], 128
    $region49: #{tpu_custom_call.1} parent=1 // pred_fallthru
      _
    %758 = vsyncpa [#allocation3], 1
    %759 = vsyncpa [#allocation6], 1
    %760 = vsyncpa [#allocation9], 1
    %761 = vsyncpa [#allocation4], 1

</llo_original>
